<compile_context>
chip_gen: v5e
topology: v5e:2x2
jax: 0.10.0
libtpu: 0.0.40
codegen_flags: <defaults>
</compile_context>

<pallas_src>
import jax
import jax.numpy as jnp
from jax.experimental import pallas as pl
from jax.experimental.pallas import tpu as pltpu

EPS = 1e-7


def zscore_kernel(x_ref, o_ref):
    # x_ref block: (TG, stride, D); o_ref block: (TG, D)
    x = x_ref[...].astype(jnp.float32)                    # cast once per block
    n = x.shape[1]                                        # static stride
    inv_n = 1.0 / n

    # single-pass statistics over the stride axis
    s1 = jnp.sum(x, axis=1)                               # (TG, D)
    s2 = jnp.sum(x * x, axis=1)                           # (TG, D)
    mean = s1 * inv_n
    var = jnp.maximum(s2 * inv_n - mean * mean, 0.0)      # clamp cancellation
    std = jnp.sqrt(var)

    # torch add_eps: +eps where std >= 0, -eps where std < 0.  std = sqrt(var)
    # is never negative, so this is exactly +EPS.
    z = mean * pl.reciprocal(std + EPS, approx=True)
    o_ref[...] = z.astype(o_ref.dtype)


def zscore(feature, stride=10, tg=512):
    B, L, D = feature.shape
    assert L % stride == 0, "L must be divisible by stride"
    G = L // stride
    num_groups = B * G
    x = feature.reshape(num_groups, stride, D)            # free wrapper reshape

    # Tile size: large (roofline-friendly), multiple of 8 for the sublane dim.
    TG = min(tg, num_groups)
    TG = max(8, ((TG + 7) // 8) * 8)
    num_blocks = pl.cdiv(num_groups, TG)
    padded = num_blocks * TG
    if padded != num_groups:
        # Zero-pad the tail block; padded groups yield 0 and are sliced off.
        x = jnp.pad(x, ((0, padded - num_groups), (0, 0), (0, 0)))

    out = pl.pallas_call(
        zscore_kernel,
        out_shape=jax.ShapeDtypeStruct((padded, D), feature.dtype),
        grid=(num_blocks,),
        in_specs=[pl.BlockSpec((TG, stride, D), lambda i: (i, 0, 0))],
        out_specs=pl.BlockSpec((TG, D), lambda i: (i, 0)),
        compiler_params=pltpu.CompilerParams(
            dimension_semantics=("parallel",),
            # ~9 MiB used at TG=512 (double-buffered padded input + output);
            # 32 MiB is safe on v5e/v6e/v7x and above the v5e 16 MiB default.
            vmem_limit_bytes=32 * 1024 * 1024,
        ),
    )(x)
    return out[:num_groups].reshape(B, G, D)


def zscore_ref(feature, stride=10):
    # pure-JAX reference reproducing the torch module
    B, L, D = feature.shape
    f = feature.reshape(B, L // stride, stride, D)
    std = jnp.std(f, axis=-2)                             # population std
    eps = jnp.where(std < 0, -EPS, EPS)
    mean = jnp.mean(f, axis=-2)
    return mean / (std + eps)


if __name__ == "__main__":
    key = jax.random.PRNGKey(0)

    # Case 1: B*G exactly fills one tile.
    B, L, D, stride = 2, 40, 32, 10                       # G = 4 -> 8 groups
    k1, k2 = jax.random.split(key)
    feature = jax.random.normal(k1, (B, L, D), dtype=jnp.float32)
    out = jax.block_until_ready(zscore(feature, stride=stride))
    ref = zscore_ref(feature, stride=stride)
    assert out.shape == (B, L // stride, D)
    # approx reciprocal (EUP) introduces ~1e-4-level relative error vs exact divide
    assert jnp.allclose(out, ref, atol=2e-3, rtol=2e-3), "mismatch vs reference (case 1)"

    # Case 2: exercises the padded-tail path (B*G not a multiple of 8).
    B2, L2 = 3, 30                                        # G = 3 -> 9 groups
    feature2 = jax.random.normal(k2, (B2, L2, D), dtype=jnp.float32)
    out2 = jax.block_until_ready(zscore(feature2, stride=stride))
    ref2 = zscore_ref(feature2, stride=stride)
    assert out2.shape == (B2, L2 // stride, D)
    assert jnp.allclose(out2, ref2, atol=2e-3, rtol=2e-3), "mismatch vs reference (case 2)"

    print("KERNEL_OK")
</pallas_src>

<mosaic_0001>
module attributes {stable_mosaic.version = 11 : i64} {
  func.func @zscore_kernel(%arg0: i32, %arg1: memref<8x10x32xf32, #tpu.memory_space<vmem>>, %arg2: memref<8x32xf32, #tpu.memory_space<vmem>>) attributes {dimension_semantics = [#tpu.dimension_semantics<parallel>], iteration_bounds = array<i64: 1>, scalar_prefetch = 0 : i64, scratch_operands = 0 : i64, tpu.core_type = #tpu.core_type<tc>, window_params = [{transform_indices = @transform_0, window_bounds = array<i64: 8, 10, 32>}, {transform_indices = @transform_1, window_bounds = array<i64: 8, 32>}]} {
    %c0 = arith.constant 0 : index
    %c0_0 = arith.constant 0 : index
    %c0_1 = arith.constant 0 : index
    %0 = vector.load %arg1[%c0, %c0_0, %c0_1] : memref<8x10x32xf32, #tpu.memory_space<vmem>>, vector<8x10x32xf32>
    %cst = arith.constant dense<0.000000e+00> : vector<8x32xf32>
    %1 = vector.multi_reduction <add>, %0, %cst [1] : vector<8x10x32xf32> to vector<8x32xf32>
    %2 = arith.mulf %0, %0 : vector<8x10x32xf32>
    %cst_2 = arith.constant dense<0.000000e+00> : vector<8x32xf32>
    %3 = vector.multi_reduction <add>, %2, %cst_2 [1] : vector<8x10x32xf32> to vector<8x32xf32>
    %cst_3 = arith.constant 1.000000e-01 : f32
    %4 = vector.broadcast %cst_3 : f32 to vector<8x32xf32>
    %5 = arith.mulf %1, %4 : vector<8x32xf32>
    %cst_4 = arith.constant 1.000000e-01 : f32
    %6 = vector.broadcast %cst_4 : f32 to vector<8x32xf32>
    %7 = arith.mulf %3, %6 : vector<8x32xf32>
    %8 = arith.mulf %5, %5 : vector<8x32xf32>
    %9 = arith.subf %7, %8 : vector<8x32xf32>
    %cst_5 = arith.constant 0.000000e+00 : f32
    %10 = vector.broadcast %cst_5 : f32 to vector<8x32xf32>
    %11 = arith.maximumf %9, %10 : vector<8x32xf32>
    %12 = math.sqrt %11 : vector<8x32xf32>
    %cst_6 = arith.constant 1.000000e-07 : f32
    %13 = vector.broadcast %cst_6 : f32 to vector<8x32xf32>
    %14 = arith.addf %12, %13 : vector<8x32xf32>
    %15 = tpu.reciprocal %14 {approx = true} : vector<8x32xf32> -> vector<8x32xf32>
    %16 = arith.mulf %5, %15 : vector<8x32xf32>
    %c0_7 = arith.constant 0 : index
    %c0_8 = arith.constant 0 : index
    %17 = vector.load %arg2[%c0_7, %c0_8] : memref<8x32xf32, #tpu.memory_space<vmem>>, vector<8x32xf32>
    tpu.vector_store %arg2[%c0_7, %c0_8], %16 {strides = array<i32>} : memref<8x32xf32, #tpu.memory_space<vmem>>, vector<8x32xf32>,
    return
  }
  func.func @transform_0(%arg0: i32) -> (i32, i32, i32) {
    %c0_i32 = arith.constant 0 : i32
    %c0_i32_0 = arith.constant 0 : i32
    %c0_i32_1 = arith.constant 0 : i32
    return %arg0, %c0_i32, %c0_i32_0 : i32, i32, i32
  }
  func.func @transform_1(%arg0: i32) -> (i32, i32) {
    %c0_i32 = arith.constant 0 : i32
    %c0_i32_0 = arith.constant 0 : i32
    return %arg0, %c0_i32 : i32, i32
  }
}

</mosaic_0001>

<llo_original>
// kernel: tpu_custom_call.1
$region0: #{tpu_custom_call.1}
  #allocation0 [shape = 'u32[]', space=smem, size = 0x4, offset = 0x4, fixed_abs, tag = 'smem constant byte address 0x4 - core index']
  #allocation1 [shape = 'u32[72,128]{1,0:T(1,128)}', space=vmem, size = 0x9000, scoped, tag = 'internal scratch']
  %s0 = inlined_call_operand.vmem [shape: f32[8,10,32], index: 0, kind: input, shape index: {}]
  %s1 = inlined_call_operand.hbm [shape: f32[8,32], index: 1, kind: output, shape index: {}]
  %s2 = sld [smem:[#allocation0]]
  $region14: #{tpu_custom_call.1} parent=0
    _
  %s4 = ssub.s32 1, %s2
  %s5 = scalar_select 0, %s4, %s2
  $region1: #{tpu_custom_call.1} parent=0
    #allocation2 [shape = 'u8[4096]{0}', space=vmem, size = 0x1000, scoped, tag = 'output window, operand 0, single buffered']
    #allocation3 [shape = 's32[1]{0}', space=sflag, size = 0x4, scoped, tag = 'scoped memory for tpu_custom_call.1']
    %6 = vsyncpa [#allocation3], 0
    // Predicated region
    $region2: #{tpu_custom_call.1} parent=1 // pred_check
      _
    $region3: #{tpu_custom_call.1} parent=1 // pred_check_branch
      %8 = sbr.rel (0) target = $region5
    $region4: #{tpu_custom_call.1} parent=1 // pred_region
      _
    $region5: #{tpu_custom_call.1} parent=1 // pred_fallthru
      _
    %v9 = vld [vmem:[%s0] sm:$0xff]
    %v10 = vld [vmem:[%s0 + $0x8] sm:$0x3]
    %v11 = vld [vmem:[%s0 + $0x10] sm:$0xff]
    %v12 = vld [vmem:[%s0 + $0x18] sm:$0x3]
    %v13 = vld [vmem:[%s0 + $0x20] sm:$0xff]
    %v14 = vld [vmem:[%s0 + $0x28] sm:$0x3]
    %v15 = vld [vmem:[%s0 + $0x30] sm:$0xff]
    %v16 = vld [vmem:[%s0 + $0x38] sm:$0x3]
    %v17 = vld [vmem:[%s0 + $0x40] sm:$0xff]
    %v18 = vld [vmem:[%s0 + $0x48] sm:$0x3]
    %v19 = vld [vmem:[%s0 + $0x50] sm:$0xff]
    %v20 = vld [vmem:[%s0 + $0x58] sm:$0x3]
    %v21 = vld [vmem:[%s0 + $0x60] sm:$0xff]
    %v22 = vld [vmem:[%s0 + $0x68] sm:$0x3]
    %v23 = vld [vmem:[%s0 + $0x70] sm:$0xff]
    %v24 = vld [vmem:[%s0 + $0x78] sm:$0x3]
    %vm25 = vcmask 261120
    %v26 = vsel %vm25, %v9, 0.0
    %vm27 = vcmask 254976
    %v28 = vsel %vm27, %v10, 0.0
    %v29 = vadd.f32 %v26, %v28
    %v30 = vrot.slane %v29, 4
    %v31 = vadd.f32 %v29, %v30
    %v32 = vrot.slane %v31, 2
    %v33 = vadd.f32 %v31, %v32
    %v34 = vrot.slane %v33, 1
    %v35 = vadd.f32 %v33, %v34
    %v36 = vsel %vm25, %v11, 0.0
    %v37 = vsel %vm27, %v12, 0.0
    %v38 = vadd.f32 %v36, %v37
    %v39 = vrot.slane %v38, 4
    %v40 = vadd.f32 %v38, %v39
    %v41 = vrot.slane %v40, 2
    %v42 = vadd.f32 %v40, %v41
    %v43 = vrot.slane %v42, 1
    %v44 = vadd.f32 %v42, %v43
    %v45 = vsel %vm25, %v13, 0.0
    %v46 = vsel %vm27, %v14, 0.0
    %v47 = vadd.f32 %v45, %v46
    %v48 = vrot.slane %v47, 4
    %v49 = vadd.f32 %v47, %v48
    %v50 = vrot.slane %v49, 2
    %v51 = vadd.f32 %v49, %v50
    %v52 = vrot.slane %v51, 1
    %v53 = vadd.f32 %v51, %v52
    %v54 = vsel %vm25, %v15, 0.0
    %v55 = vsel %vm27, %v16, 0.0
    %v56 = vadd.f32 %v54, %v55
    %v57 = vrot.slane %v56, 4
    %v58 = vadd.f32 %v56, %v57
    %v59 = vrot.slane %v58, 2
    %v60 = vadd.f32 %v58, %v59
    %v61 = vrot.slane %v60, 1
    %v62 = vadd.f32 %v60, %v61
    %v63 = vsel %vm25, %v17, 0.0
    %v64 = vsel %vm27, %v18, 0.0
    %v65 = vadd.f32 %v63, %v64
    %v66 = vrot.slane %v65, 4
    %v67 = vadd.f32 %v65, %v66
    %v68 = vrot.slane %v67, 2
    %v69 = vadd.f32 %v67, %v68
    %v70 = vrot.slane %v69, 1
    %v71 = vadd.f32 %v69, %v70
    %v72 = vsel %vm25, %v19, 0.0
    %v73 = vsel %vm27, %v20, 0.0
    %v74 = vadd.f32 %v72, %v73
    %v75 = vrot.slane %v74, 4
    %v76 = vadd.f32 %v74, %v75
    %v77 = vrot.slane %v76, 2
    %v78 = vadd.f32 %v76, %v77
    %v79 = vrot.slane %v78, 1
    %v80 = vadd.f32 %v78, %v79
    %v81 = vsel %vm25, %v21, 0.0
    %v82 = vsel %vm27, %v22, 0.0
    %v83 = vadd.f32 %v81, %v82
    %v84 = vrot.slane %v83, 4
    %v85 = vadd.f32 %v83, %v84
    %v86 = vrot.slane %v85, 2
    %v87 = vadd.f32 %v85, %v86
    %v88 = vrot.slane %v87, 1
    %v89 = vadd.f32 %v87, %v88
    %v90 = vsel %vm25, %v23, 0.0
    %v91 = vsel %vm27, %v24, 0.0
    %v92 = vadd.f32 %v90, %v91
    %v93 = vrot.slane %v92, 4
    %v94 = vadd.f32 %v92, %v93
    %v95 = vrot.slane %v94, 2
    %v96 = vadd.f32 %v94, %v95
    %v97 = vrot.slane %v96, 1
    %v98 = vadd.f32 %v96, %v97
    %v99 = vmul.f32 %v9, %v9
    %v100 = vmul.f32 %v10, %v10
    %v101 = vmul.f32 %v11, %v11
    %v102 = vmul.f32 %v12, %v12
    %v103 = vmul.f32 %v13, %v13
    %v104 = vmul.f32 %v14, %v14
    %v105 = vmul.f32 %v15, %v15
    %v106 = vmul.f32 %v16, %v16
    %v107 = vmul.f32 %v17, %v17
    %v108 = vmul.f32 %v18, %v18
    %v109 = vmul.f32 %v19, %v19
    %v110 = vmul.f32 %v20, %v20
    %v111 = vmul.f32 %v21, %v21
    %v112 = vmul.f32 %v22, %v22
    %v113 = vmul.f32 %v23, %v23
    %v114 = vmul.f32 %v24, %v24
    %v115 = vsel %vm25, %v99, 0.0
    %v116 = vsel %vm27, %v100, 0.0
    %v117 = vadd.f32 %v115, %v116
    %v118 = vrot.slane %v117, 4
    %v119 = vadd.f32 %v117, %v118
    %v120 = vrot.slane %v119, 2
    %v121 = vadd.f32 %v119, %v120
    %v122 = vrot.slane %v121, 1
    %v123 = vadd.f32 %v121, %v122
    %v124 = vsel %vm25, %v101, 0.0
    %v125 = vsel %vm27, %v102, 0.0
    %v126 = vadd.f32 %v124, %v125
    %v127 = vrot.slane %v126, 4
    %v128 = vadd.f32 %v126, %v127
    %v129 = vrot.slane %v128, 2
    %v130 = vadd.f32 %v128, %v129
    %v131 = vrot.slane %v130, 1
    %v132 = vadd.f32 %v130, %v131
    %v133 = vsel %vm25, %v103, 0.0
    %v134 = vsel %vm27, %v104, 0.0
    %v135 = vadd.f32 %v133, %v134
    %v136 = vrot.slane %v135, 4
    %v137 = vadd.f32 %v135, %v136
    %v138 = vrot.slane %v137, 2
    %v139 = vadd.f32 %v137, %v138
    %v140 = vrot.slane %v139, 1
    %v141 = vadd.f32 %v139, %v140
    %v142 = vsel %vm25, %v105, 0.0
    %v143 = vsel %vm27, %v106, 0.0
    %v144 = vadd.f32 %v142, %v143
    %v145 = vrot.slane %v144, 4
    %v146 = vadd.f32 %v144, %v145
    %v147 = vrot.slane %v146, 2
    %v148 = vadd.f32 %v146, %v147
    %v149 = vrot.slane %v148, 1
    %v150 = vadd.f32 %v148, %v149
    %v151 = vsel %vm25, %v107, 0.0
    %v152 = vsel %vm27, %v108, 0.0
    %v153 = vadd.f32 %v151, %v152
    %v154 = vrot.slane %v153, 4
    %v155 = vadd.f32 %v153, %v154
    %v156 = vrot.slane %v155, 2
    %v157 = vadd.f32 %v155, %v156
    %v158 = vrot.slane %v157, 1
    %v159 = vadd.f32 %v157, %v158
    %v160 = vsel %vm25, %v109, 0.0
    %v161 = vsel %vm27, %v110, 0.0
    %v162 = vadd.f32 %v160, %v161
    %v163 = vrot.slane %v162, 4
    %v164 = vadd.f32 %v162, %v163
    %v165 = vrot.slane %v164, 2
    %v166 = vadd.f32 %v164, %v165
    %v167 = vrot.slane %v166, 1
    %v168 = vadd.f32 %v166, %v167
    %v169 = vsel %vm25, %v111, 0.0
    %v170 = vsel %vm27, %v112, 0.0
    %v171 = vadd.f32 %v169, %v170
    %v172 = vrot.slane %v171, 4
    %v173 = vadd.f32 %v171, %v172
    %v174 = vrot.slane %v173, 2
    %v175 = vadd.f32 %v173, %v174
    %v176 = vrot.slane %v175, 1
    %v177 = vadd.f32 %v175, %v176
    %v178 = vsel %vm25, %v113, 0.0
    %v179 = vsel %vm27, %v114, 0.0
    %v180 = vadd.f32 %v178, %v179
    %v181 = vrot.slane %v180, 4
    %v182 = vadd.f32 %v180, %v181
    %v183 = vrot.slane %v182, 2
    %v184 = vadd.f32 %v182, %v183
    %v185 = vrot.slane %v184, 1
    %v186 = vadd.f32 %v184, %v185
    %v187 = vmul.f32 %v35, 0.1
    %v188 = vmul.f32 %v44, 0.1
    %v189 = vmul.f32 %v53, 0.1
    %v190 = vmul.f32 %v62, 0.1
    %v191 = vmul.f32 %v71, 0.1
    %v192 = vmul.f32 %v80, 0.1
    %v193 = vmul.f32 %v89, 0.1
    %v194 = vmul.f32 %v98, 0.1
    %v195 = vmul.f32 %v123, 0.1
    %v196 = vmul.f32 %v132, 0.1
    %v197 = vmul.f32 %v141, 0.1
    %v198 = vmul.f32 %v150, 0.1
    %v199 = vmul.f32 %v159, 0.1
    %v200 = vmul.f32 %v168, 0.1
    %v201 = vmul.f32 %v177, 0.1
    %v202 = vmul.f32 %v186, 0.1
    %v203 = vmul.f32 %v187, %v187
    %v204 = vmul.f32 %v188, %v188
    %v205 = vmul.f32 %v189, %v189
    %v206 = vmul.f32 %v190, %v190
    %v207 = vmul.f32 %v191, %v191
    %v208 = vmul.f32 %v192, %v192
    %v209 = vmul.f32 %v193, %v193
    %v210 = vmul.f32 %v194, %v194
    %v211 = vsub.f32 %v195, %v203
    %v212 = vsub.f32 %v196, %v204
    %v213 = vsub.f32 %v197, %v205
    %v214 = vsub.f32 %v198, %v206
    %v215 = vsub.f32 %v199, %v207
    %v216 = vsub.f32 %v200, %v208
    %v217 = vsub.f32 %v201, %v209
    %v218 = vsub.f32 %v202, %v210
    %v219 = vmax.f32 %v211, 0.0
    %v220 = vmax.f32 %v212, 0.0
    %v221 = vmax.f32 %v213, 0.0
    %v222 = vmax.f32 %v214, 0.0
    %v223 = vmax.f32 %v215, 0.0
    %v224 = vmax.f32 %v216, 0.0
    %v225 = vmax.f32 %v217, 0.0
    %v226 = vmax.f32 %v218, 0.0
    %v227 = vrsqrt.pop %v219
    %v228 = vmul.f32 %v227, %v219
    %v229 = vmul.f32 %v228, %v227
    %v230 = vmul.f32 0.5, %v229
    %v231 = vsub.f32 1.5, %v230
    %v232 = vmul.f32 %v227, %v231
    %v233 = vmul.f32 %v219, %v232
    %vm234 = vcmp.eq.f32.partialorder %v219, inf
    %v235 = vsel %vm234, %v219, %v233
    %vm236 = vcmp.eq.f32.partialorder %v219, 0.0
    %v237 = vand.u32 %v219, 2147483648
    %v238 = vsel %vm236, %v237, %v235
    %v239 = vrsqrt.pop %v220
    %v240 = vmul.f32 %v239, %v220
    %v241 = vmul.f32 %v240, %v239
    %v242 = vmul.f32 0.5, %v241
    %v243 = vsub.f32 1.5, %v242
    %v244 = vmul.f32 %v239, %v243
    %v245 = vmul.f32 %v220, %v244
    %vm246 = vcmp.eq.f32.partialorder %v220, inf
    %v247 = vsel %vm246, %v220, %v245
    %vm248 = vcmp.eq.f32.partialorder %v220, 0.0
    %v249 = vand.u32 %v220, 2147483648
    %v250 = vsel %vm248, %v249, %v247
    %v251 = vrsqrt.pop %v221
    %v252 = vmul.f32 %v251, %v221
    %v253 = vmul.f32 %v252, %v251
    %v254 = vmul.f32 0.5, %v253
    %v255 = vsub.f32 1.5, %v254
    %v256 = vmul.f32 %v251, %v255
    %v257 = vmul.f32 %v221, %v256
    %vm258 = vcmp.eq.f32.partialorder %v221, inf
    %v259 = vsel %vm258, %v221, %v257
    %vm260 = vcmp.eq.f32.partialorder %v221, 0.0
    %v261 = vand.u32 %v221, 2147483648
    %v262 = vsel %vm260, %v261, %v259
    %v263 = vrsqrt.pop %v222
    %v264 = vmul.f32 %v263, %v222
    %v265 = vmul.f32 %v264, %v263
    %v266 = vmul.f32 0.5, %v265
    %v267 = vsub.f32 1.5, %v266
    %v268 = vmul.f32 %v263, %v267
    %v269 = vmul.f32 %v222, %v268
    %vm270 = vcmp.eq.f32.partialorder %v222, inf
    %v271 = vsel %vm270, %v222, %v269
    %vm272 = vcmp.eq.f32.partialorder %v222, 0.0
    %v273 = vand.u32 %v222, 2147483648
    %v274 = vsel %vm272, %v273, %v271
    %v275 = vrsqrt.pop %v223
    %v276 = vmul.f32 %v275, %v223
    %v277 = vmul.f32 %v276, %v275
    %v278 = vmul.f32 0.5, %v277
    %v279 = vsub.f32 1.5, %v278
    %v280 = vmul.f32 %v275, %v279
    %v281 = vmul.f32 %v223, %v280
    %vm282 = vcmp.eq.f32.partialorder %v223, inf
    %v283 = vsel %vm282, %v223, %v281
    %vm284 = vcmp.eq.f32.partialorder %v223, 0.0
    %v285 = vand.u32 %v223, 2147483648
    %v286 = vsel %vm284, %v285, %v283
    %v287 = vrsqrt.pop %v224
    %v288 = vmul.f32 %v287, %v224
    %v289 = vmul.f32 %v288, %v287
    %v290 = vmul.f32 0.5, %v289
    %v291 = vsub.f32 1.5, %v290
    %v292 = vmul.f32 %v287, %v291
    %v293 = vmul.f32 %v224, %v292
    %vm294 = vcmp.eq.f32.partialorder %v224, inf
    %v295 = vsel %vm294, %v224, %v293
    %vm296 = vcmp.eq.f32.partialorder %v224, 0.0
    %v297 = vand.u32 %v224, 2147483648
    %v298 = vsel %vm296, %v297, %v295
    %v299 = vrsqrt.pop %v225
    %v300 = vmul.f32 %v299, %v225
    %v301 = vmul.f32 %v300, %v299
    %v302 = vmul.f32 0.5, %v301
    %v303 = vsub.f32 1.5, %v302
    %v304 = vmul.f32 %v299, %v303
    %v305 = vmul.f32 %v225, %v304
    %vm306 = vcmp.eq.f32.partialorder %v225, inf
    %v307 = vsel %vm306, %v225, %v305
    %vm308 = vcmp.eq.f32.partialorder %v225, 0.0
    %v309 = vand.u32 %v225, 2147483648
    %v310 = vsel %vm308, %v309, %v307
    %v311 = vrsqrt.pop %v226
    %v312 = vmul.f32 %v311, %v226
    %v313 = vmul.f32 %v312, %v311
    %v314 = vmul.f32 0.5, %v313
    %v315 = vsub.f32 1.5, %v314
    %v316 = vmul.f32 %v311, %v315
    %v317 = vmul.f32 %v226, %v316
    %vm318 = vcmp.eq.f32.partialorder %v226, inf
    %v319 = vsel %vm318, %v226, %v317
    %vm320 = vcmp.eq.f32.partialorder %v226, 0.0
    %v321 = vand.u32 %v226, 2147483648
    %v322 = vsel %vm320, %v321, %v319
    %v323 = vadd.f32 %v238, 1e-07
    %v324 = vadd.f32 %v250, 1e-07
    %v325 = vadd.f32 %v262, 1e-07
    %v326 = vadd.f32 %v274, 1e-07
    %v327 = vadd.f32 %v286, 1e-07
    %v328 = vadd.f32 %v298, 1e-07
    %v329 = vadd.f32 %v310, 1e-07
    %v330 = vadd.f32 %v322, 1e-07
    %v331 = vrcp.pop %v323
    %v332 = vrcp.pop %v324
    %v333 = vrcp.pop %v325
    %v334 = vrcp.pop %v326
    %v335 = vrcp.pop %v327
    %v336 = vrcp.pop %v328
    %v337 = vrcp.pop %v329
    %v338 = vrcp.pop %v330
    %v339 = vmul.f32 %v187, %v331
    %v340 = vmul.f32 %v188, %v332
    %v341 = vmul.f32 %v189, %v333
    %v342 = vmul.f32 %v190, %v334
    %v343 = vmul.f32 %v191, %v335
    %v344 = vmul.f32 %v192, %v336
    %v345 = vmul.f32 %v193, %v337
    %v346 = vmul.f32 %v194, %v338
    %vm355 = vcmask 1041409
    %v356 = vsel %vm355, %v340, %v339
    %vm357 = vcmask 1042434
    %v358 = vsel %vm357, %v341, %v356
    %vm359 = vcmask 1043459
    %v360 = vsel %vm359, %v342, %v358
    %vm361 = vcmask 1044484
    %v362 = vsel %vm361, %v343, %v360
    %vm363 = vcmask 1045509
    %v364 = vsel %vm363, %v344, %v362
    %vm365 = vcmask 1046534
    %v366 = vsel %vm365, %v345, %v364
    %vm367 = vcmask 1047559
    %v368 = vsel %vm367, %v346, %v366
    %370 = vst.msk [vmem:[#allocation2] sm:$0xff] %vm25, %v368
    // Predicated region
    $region6: #{tpu_custom_call.1} parent=1 // pred_check
      _
    $region7: #{tpu_custom_call.1} parent=1 // pred_check_branch
      %372 = sbr.rel (0) target = $region9
    $region8: #{tpu_custom_call.1} parent=1 // pred_region
      %374 = vsyncadd [#allocation3], 0
      %s376 = sshll.u32 [#allocation2], 4
      %s377 = int_to_ptr.vmem [resolvable:$true] %s376
      %s378 = sshll.u32 %s1, 4
      %s379 = int_to_ptr.hbm [resolvable:$true] %s378
      %381 = dma.vmem_to_hbm [thread:$0]  %s377, 128, %s379, [#allocation3]
    $region9: #{tpu_custom_call.1} parent=1 // pred_fallthru
      _
    // Predicated region
    $region10: #{tpu_custom_call.1} parent=1 // pred_check
      _
    $region11: #{tpu_custom_call.1} parent=1 // pred_check_branch
      %383 = sbr.rel (0) target = $region13
    $region12: #{tpu_custom_call.1} parent=1 // pred_region
      %385 = dma.done [#allocation3], 128
    $region13: #{tpu_custom_call.1} parent=1 // pred_fallthru
      _
    %386 = vsyncpa [#allocation3], 1

</llo_original>
